<compile_context>
chip_gen: v6e
topology: v6e:2x2x1
jax: 0.10.0
libtpu: 0.0.40
codegen_flags: <defaults>
</compile_context>

<pallas_src>
import functools

import jax
import jax.numpy as jnp
from jax.experimental import pallas as pl
from jax.experimental.pallas import tpu as pltpu

# ---- hyperparameters implied by SpatialPizzaClassifier.__init__ -------------
NUM_CLASSES = 10      # len(PIZZA_CLASSES)
VISION_DIM = 128      # vision hidden_size (real BLIP-base uses 768; small here)
SPAT_CIN = 4          # nn.Conv2d(4, 64, 3, padding=1)
SPAT_COUT = 64
SPAT_FEAT = 128       # nn.Linear(64, 128)
CLS_HID = 512         # nn.Linear(vision_dim, 512)
KH = KW = 3


# ---- kernel 1: Conv2d(4,64,3,pad=1) + ReLU + AdaptiveAvgPool2d((1,1)) --------
def _conv_pool_kernel(x_ref, wconv_ref, bconv_ref, pooled_ref, *,
                      W, Wp, RS, CH, inv_hw):
    f32 = jnp.float32
    t = pl.program_id(1)

    # Output block index is constant over the row-tile axis, so pooled_ref stays
    # resident in VMEM across all t and acts as the per-image accumulator.
    @pl.when(t == 0)
    def _():
        pooled_ref[...] = jnp.zeros_like(pooled_ref)

    n_chunks = (RS + CH - 1) // CH
    for c in range(n_chunks):                       # static unrolled chunk loop
        start = c * CH
        size = min(CH, RS - start)
        # Fused K=36 conv matmul: stack the 9 shifted (C, size) taps along K in
        # (kh, kw, c) minor order to match the flattened conv weight.
        taps = []
        for kh in range(KH):
            for kw in range(KW):
                d = kh * Wp + kw
                taps.append(x_ref[:, start + d:start + d + size])
        stacked = jnp.concatenate(taps, axis=0)                        # (36, size) bf16
        conv = jnp.dot(wconv_ref[...], stacked,
                       preferred_element_type=f32)                     # (64, size) f32
        conv = jnp.maximum(conv + bconv_ref[...], 0.0)                 # bias + ReLU
        # masked mean: 1/(H*W) on real columns, 0 on the 2 pad columns per row
        col = (start + jax.lax.broadcasted_iota(jnp.int32, (1, size), 1)) % Wp
        mask = jnp.where(col < W, jnp.float32(inv_hw), jnp.float32(0.0))
        pooled_ref[...] += jnp.sum(conv * mask, axis=1, keepdims=True)  # (64, 1)


# ---- kernel 2: batched head (fusion + classifier), B on the lane axis --------
def _head_kernel(pooled_ref, vis_ref, wh1_ref, bh1_ref, wc1_ref, bc1_ref,
                 wc2_ref, bc2_ref, out_ref):
    f32 = jnp.float32
    bf16 = jnp.bfloat16
    # spatial_processor Linear(64,128) is folded into the spatial half of
    # spatial_fusion (wh1 = Wf_s @ sp_w, bh1 = Wf_s @ sp_b + fuse_b); the vision
    # half (Wf_v @ pooled_features) arrives precomputed per batch as vis_ref.
    pooled = pooled_ref[...].astype(bf16)                               # (64, B)
    fused = (vis_ref[...] + bh1_ref[...]
             + jnp.dot(wh1_ref[...], pooled, preferred_element_type=f32))   # (vd, B)
    h = jnp.maximum(jnp.dot(wc1_ref[...], fused.astype(bf16),
                            preferred_element_type=f32) + bc1_ref[...], 0.0)  # (512, B)
    logits = jnp.dot(wc2_ref[...], h.astype(bf16),
                     preferred_element_type=f32) + bc2_ref[...]               # (10, B)
    out_ref[...] = logits.astype(out_ref.dtype)


# ---- wrapper -----------------------------------------------------------------
def spatial_pizza_classifier_forward(pooled_features, spatial_input, params,
                                     row_tile=None, max_tile_lanes=32768,
                                     chunk_lanes=512):
    """pooled_features: (B, VISION_DIM); spatial_input: (B, 4, H, W) NCHW."""
    B, C, H, W = spatial_input.shape
    assert C == SPAT_CIN
    Wp = W + 2
    if row_tile is None:
        TH = max(d for d in range(1, H + 1)
                 if H % d == 0 and d * Wp <= max(Wp, max_tile_lanes))
    else:
        assert H % row_tile == 0
        TH = row_tile
    T = H // TH
    RS = TH * Wp                         # flattened padded positions per tile
    SLAB = RS + 2 * Wp + 2               # + two halo rows + two halo columns
    CH = max(1, min(chunk_lanes, RS))    # in-kernel chunk width (lanes)

    # zero-padded NCHW image flattened over (H+2)*(W+2), bf16, +2 trailing zeros
    xpad = jnp.pad(spatial_input.astype(jnp.bfloat16),
                   ((0, 0), (0, 0), (1, 1), (1, 1)))                   # (B,C,H+2,W+2)
    flat = jnp.pad(xpad.reshape(B, C, (H + 2) * Wp), ((0, 0), (0, 0), (0, 2)))
    if T == 1:
        # whole image per grid step: SLAB == flat length, pure reshape, no copy
        x_slabs = flat.reshape(B, 1, C, SLAB)
    else:
        # TODO(synk): for very large images the halo'd slab stack still copies a
        # 2-row halo per tile; a memory_space=pl.ANY input + manual
        # make_async_copy double buffer would stream straight from flat HBM.
        x_slabs = jnp.stack([flat[:, :, t * RS:t * RS + SLAB] for t in range(T)],
                            axis=1)                                    # (B,T,C,SLAB)

    # conv weight flattened with (kh, kw, c) minor order on K, bf16 for the MXU
    w_conv = params['conv_w'].transpose(0, 2, 3, 1).reshape(SPAT_COUT, KH * KW * C)
    w_conv = w_conv.astype(jnp.bfloat16)
    b_conv = params['conv_b'].reshape(SPAT_COUT, 1).astype(jnp.float32)

    conv_kernel = functools.partial(_conv_pool_kernel, W=W, Wp=Wp, RS=RS, CH=CH,
                                    inv_hw=1.0 / float(H * W))
    pooled = pl.pallas_call(
        conv_kernel,
        out_shape=jax.ShapeDtypeStruct((B, SPAT_COUT, 1), jnp.float32),
        grid_spec=pltpu.PrefetchScalarGridSpec(
            num_scalar_prefetch=0,
            grid=(B, T),
            in_specs=[
                pl.BlockSpec((None, None, C, SLAB), lambda b, t: (b, t, 0, 0)),
                pl.BlockSpec((SPAT_COUT, KH * KW * C), lambda b, t: (0, 0)),
                pl.BlockSpec((SPAT_COUT, 1), lambda b, t: (0, 0)),
            ],
            out_specs=pl.BlockSpec((None, SPAT_COUT, 1), lambda b, t: (b, 0, 0)),
        ),
        compiler_params=pltpu.CompilerParams(
            dimension_semantics=("parallel", "arbitrary"),
            vmem_limit_bytes=32 * 1024 * 1024),
    )(x_slabs, w_conv, b_conv)
    pooled_t = pooled[:, :, 0].T                                       # (64, B) f32

    # fold head weights once in the wrapper (weight-only XLA ops) + vision term
    vd = pooled_features.shape[1]
    wf_v = params['fuse_w'][:, :vd]                                    # (vd, vd)
    wf_s = params['fuse_w'][:, vd:]                                    # (vd, 128)
    w_h1 = (wf_s @ params['sp_w']).astype(jnp.bfloat16)                # (vd, 64)
    b_h1 = (wf_s @ params['sp_b'] + params['fuse_b']).reshape(vd, 1).astype(jnp.float32)
    vis_t = (pooled_features.astype(jnp.float32) @ wf_v.T).T           # (vd, B)

    col = lambda v: v.reshape(-1, 1).astype(jnp.float32)
    logits_t = pl.pallas_call(
        _head_kernel,
        out_shape=jax.ShapeDtypeStruct((NUM_CLASSES, B), jnp.float32),
    )(pooled_t, vis_t, w_h1, b_h1,
      params['c1_w'].astype(jnp.bfloat16), col(params['c1_b']),
      params['c2_w'].astype(jnp.bfloat16), col(params['c2_b']))
    return logits_t.T                                                  # (B, 10)


# ---- deterministic parameter init (shapes from the nn.Module __init__) -------
def init_params(key):
    ks = jax.random.split(key, 10)
    s = 0.05
    return {
        'conv_w': s * jax.random.normal(ks[0], (SPAT_COUT, SPAT_CIN, KH, KW), jnp.float32),
        'conv_b': s * jax.random.normal(ks[1], (SPAT_COUT,), jnp.float32),
        'sp_w':   s * jax.random.normal(ks[2], (SPAT_FEAT, SPAT_COUT), jnp.float32),
        'sp_b':   s * jax.random.normal(ks[3], (SPAT_FEAT,), jnp.float32),
        'fuse_w': s * jax.random.normal(ks[4], (VISION_DIM, VISION_DIM + SPAT_FEAT), jnp.float32),
        'fuse_b': s * jax.random.normal(ks[5], (VISION_DIM,), jnp.float32),
        'c1_w':   s * jax.random.normal(ks[6], (CLS_HID, VISION_DIM), jnp.float32),
        'c1_b':   s * jax.random.normal(ks[7], (CLS_HID,), jnp.float32),
        'c2_w':   s * jax.random.normal(ks[8], (NUM_CLASSES, CLS_HID), jnp.float32),
        'c2_b':   s * jax.random.normal(ks[9], (NUM_CLASSES,), jnp.float32),
    }


# ---- plain-JAX reference (mirrors the torch forward) --------------------------
def reference_forward(pooled_features, spatial_input, p):
    conv = jax.lax.conv_general_dilated(
        spatial_input, p['conv_w'], window_strides=(1, 1), padding='SAME',
        dimension_numbers=('NCHW', 'OIHW', 'NCHW'))
    conv = jax.nn.relu(conv + p['conv_b'][None, :, None, None])
    sp = conv.mean(axis=(2, 3))                               # AdaptiveAvgPool2d + Flatten
    sp = sp @ p['sp_w'].T + p['sp_b']                         # Linear(64, 128)
    comb = jnp.concatenate([pooled_features, sp], axis=-1)
    fused = comb @ p['fuse_w'].T + p['fuse_b']                # spatial_fusion
    h = jax.nn.relu(fused @ p['c1_w'].T + p['c1_b'])          # classifier[0:2] (dropout = id)
    return h @ p['c2_w'].T + p['c2_b']                        # classifier[3]


if __name__ == "__main__":
    key = jax.random.PRNGKey(0)
    kp, kv, ks = jax.random.split(key, 3)
    params = init_params(kp)

    B, H, W = 2, 16, 16
    # Stand-in for BLIP vision_model(pixel_values).pooler_output  (B, vision_dim).
    pooled_features = jax.random.normal(kv, (B, VISION_DIM), jnp.float32)
    # spatial_data['spatial_input'] in the PyTorch code: (1, 1, B, 4, H, W);
    # the forward's .squeeze(0).squeeze(0) leaves an NCHW batch (B, 4, H, W).
    spatial_input_6d = jax.random.normal(ks, (1, 1, B, SPAT_CIN, H, W), jnp.float32)
    spatial_input = spatial_input_6d[0, 0]

    ref = reference_forward(pooled_features, spatial_input, params)

    # default path: whole image per grid step (T == 1), single conv chunk
    logits = spatial_pizza_classifier_forward(pooled_features, spatial_input, params)
    logits = jax.block_until_ready(logits)
    assert logits.shape == (B, NUM_CLASSES)
    assert jnp.allclose(logits, ref, atol=2e-2, rtol=2e-2), (logits, ref)

    # also exercise multi-row-tile accumulation + multi-chunk (ragged) conv path
    logits_tiled = spatial_pizza_classifier_forward(
        pooled_features, spatial_input, params, row_tile=4, chunk_lanes=64)
    logits_tiled = jax.block_until_ready(logits_tiled)
    assert jnp.allclose(logits_tiled, ref, atol=2e-2, rtol=2e-2), (logits_tiled, ref)

    print("KERNEL_OK")
</pallas_src>

<mosaic_0001>
module attributes {stable_mosaic.version = 11 : i64} {
  func.func @_conv_pool_kernel(%arg0: i32, %arg1: i32, %arg2: memref<1x1x4x326xbf16, #tpu.memory_space<vmem>>, %arg3: memref<64x36xbf16, #tpu.memory_space<vmem>>, %arg4: memref<64x1xf32, #tpu.memory_space<vmem>>, %arg5: memref<1x64x1xf32, #tpu.memory_space<vmem>>) attributes {dimension_semantics = [#tpu.dimension_semantics<parallel>, #tpu.dimension_semantics<arbitrary>], iteration_bounds = array<i64: 2, 1>, scalar_prefetch = 0 : i64, scratch_operands = 0 : i64, tpu.core_type = #tpu.core_type<tc>, window_params = [{transform_indices = @transform_0, window_bounds = array<i64: 1, 1, 4, 326>}, {pipeline_mode = #tpu.pipeline_mode<synchronous>, transform_indices = @transform_1, window_bounds = array<i64: 64, 36>}, {pipeline_mode = #tpu.pipeline_mode<synchronous>, transform_indices = @transform_2, window_bounds = array<i64: 64, 1>}, {transform_indices = @transform_3, window_bounds = array<i64: 1, 64, 1>}]} {
    %c0_i32 = arith.constant 0 : i32
    %0 = arith.cmpi eq, %arg1, %c0_i32 : i32
    %1 = arith.extui %0 : i1 to i32
    %c0_i32_0 = arith.constant 0 : i32
    %2 = arith.cmpi ne, %1, %c0_i32_0 : i32
    scf.if %2 {
      %cst_47 = arith.constant 0.000000e+00 : f32
      %63 = vector.broadcast %cst_47 : f32 to vector<64x1xf32>
      %c0_48 = arith.constant 0 : index
      %c0_49 = arith.constant 0 : index
      %c0_50 = arith.constant 0 : index
      %64 = vector.load %arg5[%c0_48, %c0_49, %c0_50] : memref<1x64x1xf32, #tpu.memory_space<vmem>>, vector<1x64x1xf32>
      %65 = vector.shape_cast %64 : vector<1x64x1xf32> to vector<64x1xf32>
      %66 = vector.shape_cast %63 : vector<64x1xf32> to vector<1x64x1xf32>
      tpu.vector_store %arg5[%c0_48, %c0_49, %c0_50], %66 {strides = array<i32>} : memref<1x64x1xf32, #tpu.memory_space<vmem>>, vector<1x64x1xf32>,
    } else {
    }
    %c0 = arith.constant 0 : index
    %c0_1 = arith.constant 0 : index
    %c0_2 = arith.constant 0 : index
    %c0_3 = arith.constant 0 : index
    %3 = vector.load %arg2[%c0, %c0_1, %c0_2, %c0_3] : memref<1x1x4x326xbf16, #tpu.memory_space<vmem>>, vector<1x1x4x288xbf16>
    %4 = vector.shape_cast %3 : vector<1x1x4x288xbf16> to vector<4x288xbf16>
    %c0_4 = arith.constant 0 : index
    %c0_5 = arith.constant 0 : index
    %c0_6 = arith.constant 0 : index
    %c1 = arith.constant 1 : index
    %5 = vector.load %arg2[%c0_4, %c0_5, %c0_6, %c1] : memref<1x1x4x326xbf16, #tpu.memory_space<vmem>>, vector<1x1x4x288xbf16>
    %6 = vector.shape_cast %5 : vector<1x1x4x288xbf16> to vector<4x288xbf16>
    %c0_7 = arith.constant 0 : index
    %c0_8 = arith.constant 0 : index
    %c0_9 = arith.constant 0 : index
    %c2 = arith.constant 2 : index
    %7 = vector.load %arg2[%c0_7, %c0_8, %c0_9, %c2] : memref<1x1x4x326xbf16, #tpu.memory_space<vmem>>, vector<1x1x4x288xbf16>
    %8 = vector.shape_cast %7 : vector<1x1x4x288xbf16> to vector<4x288xbf16>
    %c0_10 = arith.constant 0 : index
    %c0_11 = arith.constant 0 : index
    %c0_12 = arith.constant 0 : index
    %c18 = arith.constant 18 : index
    %9 = vector.load %arg2[%c0_10, %c0_11, %c0_12, %c18] : memref<1x1x4x326xbf16, #tpu.memory_space<vmem>>, vector<1x1x4x288xbf16>
    %10 = vector.shape_cast %9 : vector<1x1x4x288xbf16> to vector<4x288xbf16>
    %c0_13 = arith.constant 0 : index
    %c0_14 = arith.constant 0 : index
    %c0_15 = arith.constant 0 : index
    %c19 = arith.constant 19 : index
    %11 = vector.load %arg2[%c0_13, %c0_14, %c0_15, %c19] : memref<1x1x4x326xbf16, #tpu.memory_space<vmem>>, vector<1x1x4x288xbf16>
    %12 = vector.shape_cast %11 : vector<1x1x4x288xbf16> to vector<4x288xbf16>
    %c0_16 = arith.constant 0 : index
    %c0_17 = arith.constant 0 : index
    %c0_18 = arith.constant 0 : index
    %c20 = arith.constant 20 : index
    %13 = vector.load %arg2[%c0_16, %c0_17, %c0_18, %c20] : memref<1x1x4x326xbf16, #tpu.memory_space<vmem>>, vector<1x1x4x288xbf16>
    %14 = vector.shape_cast %13 : vector<1x1x4x288xbf16> to vector<4x288xbf16>
    %c0_19 = arith.constant 0 : index
    %c0_20 = arith.constant 0 : index
    %c0_21 = arith.constant 0 : index
    %c36 = arith.constant 36 : index
    %15 = vector.load %arg2[%c0_19, %c0_20, %c0_21, %c36] : memref<1x1x4x326xbf16, #tpu.memory_space<vmem>>, vector<1x1x4x288xbf16>
    %16 = vector.shape_cast %15 : vector<1x1x4x288xbf16> to vector<4x288xbf16>
    %c0_22 = arith.constant 0 : index
    %c0_23 = arith.constant 0 : index
    %c0_24 = arith.constant 0 : index
    %c37 = arith.constant 37 : index
    %17 = vector.load %arg2[%c0_22, %c0_23, %c0_24, %c37] : memref<1x1x4x326xbf16, #tpu.memory_space<vmem>>, vector<1x1x4x288xbf16>
    %18 = vector.shape_cast %17 : vector<1x1x4x288xbf16> to vector<4x288xbf16>
    %c0_25 = arith.constant 0 : index
    %c0_26 = arith.constant 0 : index
    %c0_27 = arith.constant 0 : index
    %c38 = arith.constant 38 : index
    %19 = vector.load %arg2[%c0_25, %c0_26, %c0_27, %c38] : memref<1x1x4x326xbf16, #tpu.memory_space<vmem>>, vector<1x1x4x288xbf16>
    %20 = vector.shape_cast %19 : vector<1x1x4x288xbf16> to vector<4x288xbf16>
    %21 = tpu.concatenate %4, %6, %8, %10, %12, %14, %16, %18, %20 in 0 : vector<4x288xbf16>, vector<4x288xbf16>, vector<4x288xbf16>, vector<4x288xbf16>, vector<4x288xbf16>, vector<4x288xbf16>, vector<4x288xbf16>, vector<4x288xbf16>, vector<4x288xbf16> -> vector<36x288xbf16>
    %c0_28 = arith.constant 0 : index
    %c0_29 = arith.constant 0 : index
    %22 = vector.load %arg3[%c0_28, %c0_29] : memref<64x36xbf16, #tpu.memory_space<vmem>>, vector<64x36xbf16>
    %cst = arith.constant dense<0.000000e+00> : vector<64x288xf32>
    %23 = tpu.matmul %22, %21, %cst {dimension_numbers = #tpu.dot_dimension_numbers<[1], [0], [0], [1], [0, 0, 1, 1], [], []>} : vector<64x36xbf16>, vector<36x288xbf16>, vector<64x288xf32> -> vector<64x288xf32>
    %c0_30 = arith.constant 0 : index
    %c0_31 = arith.constant 0 : index
    %24 = vector.load %arg4[%c0_30, %c0_31] : memref<64x1xf32, #tpu.memory_space<vmem>>, vector<64x1xf32>
    %25 = vector.broadcast %24 : vector<64x1xf32> to vector<64x288xf32>
    %26 = arith.addf %23, %25 : vector<64x288xf32>
    %cst_32 = arith.constant 0.000000e+00 : f32
    %27 = vector.broadcast %cst_32 : f32 to vector<64x288xf32>
    %28 = arith.maximumf %26, %27 : vector<64x288xf32>
    %29 = tpu.iota {dimensions = array<i32: 1>} : vector<1x288xi32>
    %c0_i32_33 = arith.constant 0 : i32
    %30 = vector.broadcast %c0_i32_33 : i32 to vector<1x288xi32>
    %31 = arith.addi %30, %29 : vector<1x288xi32>
    %c18_i32 = arith.constant 18 : i32
    %c0_i32_34 = arith.constant 0 : i32
    %32 = arith.cmpi eq, %c18_i32, %c0_i32_34 : i32
    %c1_i32 = arith.constant 1 : i32
    %33 = arith.select %32, %c1_i32, %c18_i32 : i32
    %34 = vector.broadcast %33 : i32 to vector<1x288xi32>
    %35 = arith.remsi %31, %34 : vector<1x288xi32>
    %c0_i32_35 = arith.constant 0 : i32
    %36 = vector.broadcast %c0_i32_35 : i32 to vector<1x288xi32>
    %37 = arith.cmpi ne, %35, %36 : vector<1x288xi32>
    %c0_i32_36 = arith.constant 0 : i32
    %38 = vector.broadcast %c0_i32_36 : i32 to vector<1x288xi32>
    %39 = arith.cmpi slt, %35, %38 : vector<1x288xi32>
    %c0_i32_37 = arith.constant 0 : i32
    %40 = arith.cmpi slt, %33, %c0_i32_37 : i32
    %41 = vector.broadcast %40 : i1 to vector<1x288xi1>
    %42 = vector.broadcast %41 : vector<1x288xi1> to vector<1x288xi1>
    %43 = arith.xori %39, %42 : vector<1x288xi1>
    %44 = arith.andi %43, %37 : vector<1x288xi1>
    %45 = vector.broadcast %33 : i32 to vector<1x288xi32>
    %46 = arith.addi %35, %45 : vector<1x288xi32>
    %47 = arith.select %44, %46, %35 : vector<1x288xi1>, vector<1x288xi32>
    %c16_i32 = arith.constant 16 : i32
    %48 = vector.broadcast %c16_i32 : i32 to vector<1x288xi32>
    %49 = arith.cmpi slt, %47, %48 : vector<1x288xi32>
    %cst_38 = arith.constant 3.906250e-03 : f32
    %cst_39 = arith.constant 0.000000e+00 : f32
    %50 = vector.broadcast %cst_38 : f32 to vector<1x288xf32>
    %51 = vector.broadcast %cst_39 : f32 to vector<1x288xf32>
    %52 = arith.select %49, %50, %51 : vector<1x288xi1>, vector<1x288xf32>
    %c0_40 = arith.constant 0 : index
    %c0_41 = arith.constant 0 : index
    %c0_42 = arith.constant 0 : index
    %53 = vector.load %arg5[%c0_40, %c0_41, %c0_42] : memref<1x64x1xf32, #tpu.memory_space<vmem>>, vector<1x64x1xf32>
    %54 = vector.shape_cast %53 : vector<1x64x1xf32> to vector<64x1xf32>
    %55 = vector.broadcast %52 : vector<1x288xf32> to vector<64x288xf32>
    %56 = arith.mulf %28, %55 : vector<64x288xf32>
    %cst_43 = arith.constant dense<0.000000e+00> : vector<64xf32>
    %57 = vector.multi_reduction <add>, %56, %cst_43 [1] : vector<64x288xf32> to vector<64xf32>
    %58 = vector.shape_cast %57 : vector<64xf32> to vector<64x1xf32>
    %59 = arith.addf %54, %58 : vector<64x1xf32>
    %c0_44 = arith.constant 0 : index
    %c0_45 = arith.constant 0 : index
    %c0_46 = arith.constant 0 : index
    %60 = vector.load %arg5[%c0_44, %c0_45, %c0_46] : memref<1x64x1xf32, #tpu.memory_space<vmem>>, vector<1x64x1xf32>
    %61 = vector.shape_cast %60 : vector<1x64x1xf32> to vector<64x1xf32>
    %62 = vector.shape_cast %59 : vector<64x1xf32> to vector<1x64x1xf32>
    tpu.vector_store %arg5[%c0_44, %c0_45, %c0_46], %62 {strides = array<i32>} : memref<1x64x1xf32, #tpu.memory_space<vmem>>, vector<1x64x1xf32>,
    return
  }
  func.func @transform_0(%arg0: i32, %arg1: i32) -> (i32, i32, i32, i32) {
    %c0_i32 = arith.constant 0 : i32
    %c0_i32_0 = arith.constant 0 : i32
    %c0_i32_1 = arith.constant 0 : i32
    return %arg0, %arg1, %c0_i32, %c0_i32_0 : i32, i32, i32, i32
  }
  func.func @transform_1(%arg0: i32, %arg1: i32) -> (i32, i32) {
    %c0_i32 = arith.constant 0 : i32
    %c0_i32_0 = arith.constant 0 : i32
    %c0_i32_1 = arith.constant 0 : i32
    return %c0_i32, %c0_i32_0 : i32, i32
  }
  func.func @transform_2(%arg0: i32, %arg1: i32) -> (i32, i32) {
    %c0_i32 = arith.constant 0 : i32
    %c0_i32_0 = arith.constant 0 : i32
    %c0_i32_1 = arith.constant 0 : i32
    return %c0_i32, %c0_i32_0 : i32, i32
  }
  func.func @transform_3(%arg0: i32, %arg1: i32) -> (i32, i32, i32) {
    %c0_i32 = arith.constant 0 : i32
    %c0_i32_0 = arith.constant 0 : i32
    %c0_i32_1 = arith.constant 0 : i32
    return %arg0, %c0_i32, %c0_i32_0 : i32, i32, i32
  }
}

</mosaic_0001>

<llo_original>
// kernel: tpu_custom_call.1
$region0: #{tpu_custom_call.1}
  #allocation0 [shape = 'u32[]', space=smem, size = 0x4, offset = 0x4, fixed_abs, tag = 'smem constant byte address 0x4 - core index']
  #allocation1 [shape = 'u32[144,128]{1,0:T(1,128)}', space=vmem, size = 0x12000, scoped, tag = 'internal scratch']
  %s0 = inlined_call_operand.vmem [shape: bf16[2,1,4,326], index: 0, kind: input, shape index: {}]
  %s1 = inlined_call_operand.vmem [shape: bf16[64,36], index: 1, kind: input, shape index: {}]
  %s2 = inlined_call_operand.vmem [shape: f32[64,1], index: 2, kind: input, shape index: {}]
  %s3 = inlined_call_operand.vmem [shape: f32[2,64,1], index: 3, kind: output, shape index: {}]
  %s4 = sld [smem:[#allocation0]]
  $region49: #{tpu_custom_call.1} parent=0
    _
  %s6 = ssub.s32 1, %s4
  %s7 = scalar_select 0, %s6, %s4
  loop: start=0, step=1, limit=4
  $region2: #{tpu_custom_call.1} parent=0 // loop_pre_header
    _
  $region3: #{tpu_custom_call.1} parent=0 // loop_header
    %s9 = sphi 0, %s13
    %p10 = scmp.ge.s32.totalorder %s9, 4
    %s16 = sphi 0, %s28
    %s17 = sphi 0, %s24
    %s18 = sphi 0, %s16
    %s19 = sphi 0, %s17
    %s20 = sphi 0, %s18
    %s21 = sphi 0, %s19
    %s33 = sphi 0, %s35
    %s36 = sphi 0, %s33
    %s37 = sphi 0, %s36
    %s53 = sphi 0, %s37
    %s57 = sphi 0, %s57
    %s59 = sphi 0, %s57
    %s60 = sphi 0, %s59
    %s74 = sphi 0, %s60
    %s78 = sphi 0, %s78
    %s80 = sphi 0, %s78
    %s81 = sphi 0, %s80
    %s95 = sphi 0, %s81
    %s101 = sphi 0, %s103
    %s104 = sphi 0, %s101
    %s105 = sphi 0, %s104
    %s121 = sphi 0, %s105
  $region4: #{tpu_custom_call.1} parent=0 // loop_header_branch
    %12 = sbr.rel (%p10) target = $region8
  $region5: #{tpu_custom_call.1} parent=0 // loop_body
    %s14 = ssub.s32 %s9, 1
    %s15 = ssub.s32 %s9, 2
    %s22 = sadd.s32 1, %s17
    %p23 = scmp.ge.s32.totalorder %s22, 1
    %s24 = scalar_select %p23, 0, %s22
    %s25 = sadd.s32 1, %s16
    %s26 = scalar_select %p23, %s25, %s16
    %p27 = scmp.ge.s32.totalorder %s26, 2
    %s28 = scalar_select %p27, 0, %s26
    %s29 = ssub.s32 %s16, %s28
    %s30 = ssub.s32 %s17, %s24
    %s31 = sor.u32 %s29, %s30
    %p32 = scmp.eq.s32.totalorder %s31, 0
    %s34 = sadd.s32 %s33, 1
    %s35 = scalar_select %p32, %s33, %s34
    %p38 = pneg %p32
    %p39 = scmp.eq.s32.totalorder %s9, 1
    %p40 = por %p38, %p39
    %p41 = scmp.ne.s32.totalorder %s33, %s36
    %p42 = scmp.eq.s32.totalorder %s9, 0
    %p43 = por %p41, %p42
    %p44 = scmp.ne.s32.totalorder %s33, %s36
    %p45 = scmp.eq.s32.totalorder %s14, 1
    %p46 = por %p44, %p45
    %p47 = scmp.ne.s32.totalorder %s36, %s37
    %p48 = scmp.eq.s32.totalorder %s14, 0
    %p49 = por %p47, %p48
    %p50 = scmp.ne.s32.totalorder %s36, %s37
    %p51 = scmp.eq.s32.totalorder %s15, 1
    %p52 = por %p50, %p51
    %p54 = scmp.ne.s32.totalorder %s37, %s53
    %p55 = scmp.eq.s32.totalorder %s15, 0
    %p56 = por %p54, %p55
    %s58 = sadd.s32 %s57, 1
    %p61 = scmp.eq.s32.totalorder %s9, 1
    %p62 = scmp.ne.s32.totalorder %s57, %s59
    %p63 = scmp.eq.s32.totalorder %s9, 0
    %p64 = por %p62, %p63
    %p65 = scmp.ne.s32.totalorder %s57, %s59
    %p66 = scmp.eq.s32.totalorder %s14, 1
    %p67 = por %p65, %p66
    %p68 = scmp.ne.s32.totalorder %s59, %s60
    %p69 = scmp.eq.s32.totalorder %s14, 0
    %p70 = por %p68, %p69
    %p71 = scmp.ne.s32.totalorder %s59, %s60
    %p72 = scmp.eq.s32.totalorder %s15, 1
    %p73 = por %p71, %p72
    %p75 = scmp.ne.s32.totalorder %s60, %s74
    %p76 = scmp.eq.s32.totalorder %s15, 0
    %p77 = por %p75, %p76
    %s79 = sadd.s32 %s78, 1
    %p82 = scmp.eq.s32.totalorder %s9, 1
    %p83 = scmp.ne.s32.totalorder %s78, %s80
    %p84 = scmp.eq.s32.totalorder %s9, 0
    %p85 = por %p83, %p84
    %p86 = scmp.ne.s32.totalorder %s78, %s80
    %p87 = scmp.eq.s32.totalorder %s14, 1
    %p88 = por %p86, %p87
    %p89 = scmp.ne.s32.totalorder %s80, %s81
    %p90 = scmp.eq.s32.totalorder %s14, 0
    %p91 = por %p89, %p90
    %p92 = scmp.ne.s32.totalorder %s80, %s81
    %p93 = scmp.eq.s32.totalorder %s15, 1
    %p94 = por %p92, %p93
    %p96 = scmp.ne.s32.totalorder %s81, %s95
    %p97 = scmp.eq.s32.totalorder %s15, 0
    %p98 = por %p96, %p97
    %s99 = ssub.s32 %s16, %s28
    %p100 = scmp.eq.s32.totalorder %s99, 0
    %s102 = sadd.s32 %s101, 1
    %s103 = scalar_select %p100, %s101, %s102
    %p106 = pneg %p100
    %p107 = scmp.eq.s32.totalorder %s9, 1
    %p108 = por %p106, %p107
    %p109 = scmp.ne.s32.totalorder %s101, %s104
    %p110 = scmp.eq.s32.totalorder %s9, 0
    %p111 = por %p109, %p110
    %p112 = scmp.ne.s32.totalorder %s101, %s104
    %p113 = scmp.eq.s32.totalorder %s14, 1
    %p114 = por %p112, %p113
    %p115 = scmp.ne.s32.totalorder %s104, %s105
    %p116 = scmp.eq.s32.totalorder %s14, 0
    %p117 = por %p115, %p116
    %p118 = scmp.ne.s32.totalorder %s104, %s105
    %p119 = scmp.eq.s32.totalorder %s15, 1
    %p120 = por %p118, %p119
    %p122 = scmp.ne.s32.totalorder %s105, %s121
    %p123 = scmp.eq.s32.totalorder %s15, 0
    %p124 = por %p122, %p123
    %p125 = scmp.le.s32.totalorder 1, %s9
    %p126 = scmp.lt.s32.totalorder %s9, 3
    %p127 = pnand %p125, %p126
    %p128 = pneg %p127
    // Predicated region
    $region9: #{tpu_custom_call.1} parent=5 // pred_check
      _
    $region10: #{tpu_custom_call.1} parent=5 // pred_check_branch
      %130 = sbr.rel (%p127) target = $region12
    $region11: #{tpu_custom_call.1} parent=5 // pred_region
      %s131 = ssub.s32 %s9, 1
      // Predicated region
      $region13: #{tpu_custom_call.1} parent=11 // pred_check
        %p132 = pneg %p70
      $region14: #{tpu_custom_call.1} parent=11 // pred_check_branch
        %134 = sbr.rel (%p132) target = $region16
      $region15: #{tpu_custom_call.1} parent=11 // pred_region
        _
      $region16: #{tpu_custom_call.1} parent=11 // pred_fallthru
        _
      // Predicated region
      $region17: #{tpu_custom_call.1} parent=11 // pred_check
        %p135 = pneg %p91
      $region18: #{tpu_custom_call.1} parent=11 // pred_check_branch
        %137 = sbr.rel (%p135) target = $region20
      $region19: #{tpu_custom_call.1} parent=11 // pred_region
        _
      $region20: #{tpu_custom_call.1} parent=11 // pred_fallthru
        _
    $region12: #{tpu_custom_call.1} parent=5 // pred_fallthru
      _
    %p138 = scmp.lt.s32.totalorder %s9, 2
    // Predicated region
    $region21: #{tpu_custom_call.1} parent=5 // pred_check
      %p139 = pneg %p138
    $region22: #{tpu_custom_call.1} parent=5 // pred_check_branch
      %141 = sbr.rel (%p139) target = $region24
    $region23: #{tpu_custom_call.1} parent=5 // pred_region
      // Predicated region
      $region25: #{tpu_custom_call.1} parent=23 // pred_check
        %p142 = pneg %p43
      $region26: #{tpu_custom_call.1} parent=23 // pred_check_branch
        %144 = sbr.rel (%p142) target = $region28
      $region27: #{tpu_custom_call.1} parent=23 // pred_region
        %p145 = scmp.lt.s32.totalorder %s16, 1
        %s146 = scalar_select %p145, %s16, 1
        %p147 = scmp.lt.s32.totalorder %s17, 0
        %s148 = scalar_select %p147, %s17, 0
        %s149 = smul.addr %s148, 3
        %s150 = smul.addr %s146, 3
        %s151 = sadd.s32 %s149, %s150
        %s152 = smul.addr %s151, 2
        %s153 = scalar_lea.vmem %s0, %s152
      $region28: #{tpu_custom_call.1} parent=23 // pred_fallthru
        _
    $region24: #{tpu_custom_call.1} parent=5 // pred_fallthru
      _
    %p154 = scmp.le.s32.totalorder 1, %s9
    %p155 = scmp.lt.s32.totalorder %s9, 3
    %p156 = pnand %p154, %p155
    %p157 = pneg %p156
    // Predicated region
    $region29: #{tpu_custom_call.1} parent=5 // pred_check
      _
    $region30: #{tpu_custom_call.1} parent=5 // pred_check_branch
      %159 = sbr.rel (%p156) target = $region32
    $region31: #{tpu_custom_call.1} parent=5 // pred_region
      %s160 = ssub.s32 %s9, 1
      %p161 = scmp.lt.s32.totalorder %s18, 1
      %s162 = scalar_select %p161, %s18, 1
      %p163 = scmp.lt.s32.totalorder %s19, 0
      %s164 = scalar_select %p163, %s19, 0
      %s165 = smul.addr %s164, 3
      %s166 = smul.addr %s162, 3
      %s167 = sadd.s32 %s165, %s166
      %s168 = smul.addr %s167, 2
      %s169 = scalar_lea.vmem %s0, %s168
      %p170 = pneg %p49
      %p171 = pneg %p46
      %p172 = pneg %p70
      %p173 = pneg %p67
      %p174 = pneg %p91
      %p175 = pneg %p88
      %p176 = pneg %p117
      %p177 = pneg %p114
      %p178 = scmp.lt.s32.totalorder %s18, 1
      %s179 = scalar_select %p178, %s18, 1
      %s180 = smul.addr %s179, 8
      %s181 = smul.addr %s180, 8
      %s182 = scalar_lea.vmem %s3, %s181
      %p183 = scmp.lt.s32.totalorder %s18, 1
      %s184 = scalar_select %p183, %s18, 1
      %p185 = scmp.lt.s32.totalorder %s19, 0
      %s186 = scalar_select %p185, %s19, 0
      %s187 = smul.addr %s186, 3
      %s188 = smul.addr %s184, 3
      %s189 = sadd.s32 %s187, %s188
      %s190 = smul.addr %s189, 2
      %s191 = scalar_lea.vmem %s0, %s190
      %p192 = scmp.lt.s32.totalorder %s18, 1
      %s193 = scalar_select %p192, %s18, 1
      %s194 = smul.addr %s193, 8
      %s195 = smul.addr %s194, 8
      %s196 = scalar_lea.vmem %s3, %s195
      %p198 = scmp.eq.s32.totalorder %s19, 0
      // Predicated region
      $region33: #{tpu_custom_call.1} parent=31 // pred_check
        %p199 = pneg %p198
      $region34: #{tpu_custom_call.1} parent=31 // pred_check_branch
        %201 = sbr.rel (%p199) target = $region36
      $region35: #{tpu_custom_call.1} parent=31 // pred_region
        %vm202 = vcmask 7168
        %203 = vst.msk [vmem:[%s196] sm:$0xff] %vm202, 0.0
        %204 = vst.msk [vmem:[%s196 + $0x8] sm:$0xff] %vm202, 0.0
        %205 = vst.msk [vmem:[%s196 + $0x10] sm:$0xff] %vm202, 0.0
        %206 = vst.msk [vmem:[%s196 + $0x18] sm:$0xff] %vm202, 0.0
        %207 = vst.msk [vmem:[%s196 + $0x20] sm:$0xff] %vm202, 0.0
        %208 = vst.msk [vmem:[%s196 + $0x28] sm:$0xff] %vm202, 0.0
        %209 = vst.msk [vmem:[%s196 + $0x30] sm:$0xff] %vm202, 0.0
        %210 = vst.msk [vmem:[%s196 + $0x38] sm:$0xff] %vm202, 0.0
      $region36: #{tpu_custom_call.1} parent=31 // pred_fallthru
        _
      %v211 = vld [vmem:[%s191] sm:$0x3f]
      %v213 = vcombine.high %v211, %v211
      %v215 = vunpack.c.l.s4 1983009808
      %v216 = vunpack.c.0.s8 %v215
      %v217 = vlaneseq
      %v218 = vshrl.u32 %v217, 7
      %v219 = vsub.s32 %v216, %v218
      %v220 = vrot.slane %v211, %v219
      %v222 = vunpack.c.l.s4 1983009808
      %v223 = vunpack.c.0.s8 %v222
      %v224 = vlaneseq
      %v225 = vshrl.u32 %v224, 7
      %v226 = vsub.s32 %v223, %v225
      %v227 = vrot.slane %v213, %v226
      %v228 = vcombine.high %v220, %v220
      %v229 = vcombine.low %v211, %v211
      %v231 = vunpack.c.l.s4 1983009808
      %v232 = vunpack.c.0.s8 %v231
      %v233 = vlaneseq
      %v234 = vshrl.u32 %v233, 7
      %v235 = vsub.s32 %v232, %v234
      %v236 = vrot.slane %v229, %v235
      %v237 = vcombine.high %v236, %v236
      %238 = vrot.lane.b32.xlu0 %v236, 127
      %v239 = vpop.permute.xlu0 %238
      %240 = vrot.lane.b32.xlu0 %v237, 127
      %v241 = vpop.permute.xlu0 %240
      %242 = vrot.lane.b32.xlu0 %v220, 127
      %v243 = vpop.permute.xlu0 %242
      %vm244 = vcmask 1039360
      %v245 = vsel %vm244, %v239, %v241
      %v246 = vsel %vm244, %v241, %v243
      %v247 = vcombine.low %v220, %v220
      %v248 = vcombine.low %v227, %v227
      %249 = vrot.lane.b32.xlu0 %v247, 126
      %v250 = vpop.permute.xlu0 %249
      %251 = vrot.lane.b32.xlu0 %v220, 126
      %v252 = vpop.permute.xlu0 %251
      %253 = vrot.lane.b32.xlu0 %v248, 126
      %v254 = vpop.permute.xlu0 %253
      %vm255 = vcmask 1031168
      %v256 = vsel %vm255, %v250, %v252
      %v257 = vsel %vm255, %v252, %v254
      %v258 = vcombine.low %v236, %v236
      %259 = vrot.lane.b32.xlu0 %v258, 110
      %v260 = vpop.permute.xlu0 %259
      %261 = vrot.lane.b32.xlu0 %v236, 110
      %v262 = vpop.permute.xlu0 %261
      %263 = vrot.lane.b32.xlu0 %v247, 110
      %v264 = vpop.permute.xlu0 %263
      %vm265 = vcmask 900096
      %v266 = vsel %vm265, %v260, %v262
      %v267 = vsel %vm265, %v262, %v264
      %268 = vrot.lane.b32.xlu0 %v220, 109
      %v269 = vpop.permute.xlu0 %268
      %270 = vrot.lane.b32.xlu0 %v228, 109
      %v271 = vpop.permute.xlu0 %270
      %272 = vrot.lane.b32.xlu0 %v227, 109
      %v273 = vpop.permute.xlu0 %272
      %vm274 = vcmask 891904
      %v275 = vsel %vm274, %v269, %v271
      %v276 = vsel %vm274, %v271, %v273
      %277 = vrot.lane.b32.xlu0 %v236, 108
      %v278 = vpop.permute.xlu0 %277
      %279 = vrot.lane.b32.xlu0 %v237, 108
      %v280 = vpop.permute.xlu0 %279
      %281 = vrot.lane.b32.xlu0 %v220, 108
      %v282 = vpop.permute.xlu0 %281
      %vm283 = vcmask 883712
      %v284 = vsel %vm283, %v278, %v280
      %v285 = vsel %vm283, %v280, %v282
      %286 = vrot.lane.b32.xlu0 %v247, 92
      %v287 = vpop.permute.xlu0 %286
      %288 = vrot.lane.b32.xlu0 %v220, 92
      %v289 = vpop.permute.xlu0 %288
      %290 = vrot.lane.b32.xlu0 %v248, 92
      %v291 = vpop.permute.xlu0 %290
      %vm292 = vcmask 752640
      %v293 = vsel %vm292, %v287, %v289
      %v294 = vsel %vm292, %v289, %v291
      %295 = vrot.lane.b32.xlu0 %v258, 91
      %v296 = vpop.permute.xlu0 %295
      %297 = vrot.lane.b32.xlu0 %v236, 91
      %v298 = vpop.permute.xlu0 %297
      %299 = vrot.lane.b32.xlu0 %v247, 91
      %v300 = vpop.permute.xlu0 %299
      %vm301 = vcmask 744448
      %v302 = vsel %vm301, %v296, %v298
      %v303 = vsel %vm301, %v298, %v300
      %304 = vrot.lane.b32.xlu0 %v220, 90
      %v305 = vpop.permute.xlu0 %304
      %306 = vrot.lane.b32.xlu0 %v228, 90
      %v307 = vpop.permute.xlu0 %306
      %308 = vrot.lane.b32.xlu0 %v227, 90
      %v309 = vpop.permute.xlu0 %308
      %vm310 = vcmask 736256
      %v311 = vsel %vm310, %v305, %v307
      %v312 = vsel %vm310, %v307, %v309
      %vm313 = vcmask 1041408
      %v316 = vsel %vm313, %v220, %v245
      %v319 = vsel %vm313, %v228, %v246
      %v322 = vsel %vm313, %v227, %v243
      %vm323 = vcmask 1043456
      %v325 = vsel %vm323, %v316, %v256
      %v327 = vsel %vm323, %v319, %v257
      %v329 = vsel %vm323, %v322, %v254
      %vm330 = vcmask 1045504
      %v332 = vsel %vm330, %v325, %v266
      %v335 = vsel %vm330, %v327, %v267
      %v338 = vsel %vm330, %v329, %v264
      %v342 = vsel %vm313, %v275, %v284
      %v345 = vsel %vm313, %v276, %v285
      %v348 = vsel %vm313, %v273, %v282
      %v350 = vsel %vm323, %v342, %v293
      %v352 = vsel %vm323, %v345, %v294
      %v354 = vsel %vm323, %v348, %v291
      %v356 = vsel %vm330, %v350, %v302
      %v359 = vsel %vm330, %v352, %v303
      %v362 = vsel %vm330, %v354, %v300
      %v364 = vld [vmem:[%s1] sm:$0xf]
      %v365 = vld [vmem:[%s1 + $0x4] sm:$0xf]
      %v366 = vld [vmem:[%s1 + $0x8] sm:$0xf]
      %v367 = vld [vmem:[%s1 + $0xc] sm:$0xf]
      %v368 = vld [vmem:[%s1 + $0x10] sm:$0xf]
      %v369 = vld [vmem:[%s1 + $0x14] sm:$0xf]
      %v370 = vld [vmem:[%s1 + $0x18] sm:$0xf]
      %v371 = vld [vmem:[%s1 + $0x1c] sm:$0xf]
      %v372 = vld [vmem:[%s2] sm:$0xff]
      %v373 = vld [vmem:[%s2 + $0x8] sm:$0xff]
      %v374 = vld [vmem:[%s2 + $0x10] sm:$0xff]
      %v375 = vld [vmem:[%s2 + $0x18] sm:$0xff]
      %v376 = vld [vmem:[%s2 + $0x20] sm:$0xff]
      %v377 = vld [vmem:[%s2 + $0x28] sm:$0xff]
      %v378 = vld [vmem:[%s2 + $0x30] sm:$0xff]
      %v379 = vld [vmem:[%s2 + $0x38] sm:$0xff]
      %381 = vset.pattern.permute.xlu0 0
      %382 = vperm.xlu0 %381, %v372
      %v383 = vpop.permute.xlu0 %382
      %386 = vset.pattern.permute.xlu0 0
      %387 = vperm.xlu0 %386, %v373
      %v388 = vpop.permute.xlu0 %387
      %391 = vset.pattern.permute.xlu0 0
      %392 = vperm.xlu0 %391, %v374
      %v393 = vpop.permute.xlu0 %392
      %396 = vset.pattern.permute.xlu0 0
      %397 = vperm.xlu0 %396, %v375
      %v398 = vpop.permute.xlu0 %397
      %401 = vset.pattern.permute.xlu0 0
      %402 = vperm.xlu0 %401, %v376
      %v403 = vpop.permute.xlu0 %402
      %406 = vset.pattern.permute.xlu0 0
      %407 = vperm.xlu0 %406, %v377
      %v408 = vpop.permute.xlu0 %407
      %411 = vset.pattern.permute.xlu0 0
      %412 = vperm.xlu0 %411, %v378
      %v413 = vpop.permute.xlu0 %412
      %416 = vset.pattern.permute.xlu0 0
      %417 = vperm.xlu0 %416, %v379
      %v418 = vpop.permute.xlu0 %417
      %v428 = vunpack.c.l.b16 %v364
      %v429 = vunpack.c.l.b16 %v365
      %v430 = vunpack.c.l.b16 %v366
      %v431 = vunpack.c.l.b16 %v367
      %v432 = vunpack.c.l.b16 %v368
      %v433 = vunpack.c.l.b16 %v369
      %v434 = vunpack.c.l.b16 %v370
      %v435 = vunpack.c.l.b16 %v371
      %v436 = vpack.c.b16 %v429, %v428
      %v437 = vpack.c.b16 %v431, %v430
      %v438 = vpack.c.b16 %v433, %v432
      %v439 = vpack.c.b16 %v435, %v434
      %vm440 = vcmask 293888
      %v442 = vsel %vm440, %v436, 0
      %v445 = vsel %vm440, %v437, 0
      %v448 = vsel %vm440, %v438, 0
      %v451 = vsel %vm440, %v439, 0
      %v454 = vsel %vm313, %v311, 0
      %v457 = vsel %vm313, %v312, 0
      %v460 = vsel %vm313, %v309, 0
      %462 = vmatprep.subr.bf16.mxu0 0
      %463 = vmatpush1.bf16.msra.mxu0 0
      %464 = vmatprep.subr.bf16.mxu0 0
      %465 = vmatpush1.bf16.msra.mxu0 0
      %466 = vmatprep.subr.bf16.mxu0 0
      %467 = vmatpush1.bf16.msra.mxu0 0
      %468 = vmatprep.subr.bf16.mxu0 0
      %469 = vmatpush1.bf16.msra.mxu0 0
      %470 = vmatprep.subr.bf16.mxu0 0
      %471 = vmatpush1.bf16.msra.mxu0 0
      %472 = vmatprep.subr.bf16.mxu0 %v457
      %473 = vmatpush1.bf16.msra.mxu0 %v454
      %474 = vmatprep.subr.bf16.mxu0 %v359
      %475 = vmatpush1.bf16.msra.mxu0 %v356
      %476 = vmatprep.subr.bf16.mxu0 %v335
      %477 = vmatpush1.bf16.msra.mxu0 %v332
      %478 = vmatprep.subr.bf16.mxu0 0
      %479 = vmatpush2.bf16.msra.mxu0 0
      %480 = vmatprep.subr.bf16.mxu0 0
      %481 = vmatpush2.bf16.msra.mxu0 0
      %482 = vmatprep.subr.bf16.mxu0 0
      %483 = vmatpush2.bf16.msra.mxu0 0
      %484 = vmatprep.subr.bf16.mxu0 0
      %485 = vmatpush2.bf16.msra.mxu0 0
      %486 = vmatprep.subr.bf16.mxu0 0
      %487 = vmatpush2.bf16.msra.mxu0 0
      %488 = vmatprep.subr.bf16.mxu0 0
      %489 = vmatpush2.bf16.msra.mxu0 0
      %490 = vmatprep.subr.bf16.mxu0 0
      %491 = vmatpush2.bf16.msra.mxu0 0
      %492 = vmatprep.subr.bf16.mxu0 0
      %493 = vmatpush2.bf16.msra.mxu0 0
      %494 = vmatprep.mubr.bf16.mxu0 0
      %495 = vmatmul.mubr.bf16.gmra.mxu0 %v442
      %v496 = vpop.f32.mrf.mxu0
      %v497 = vadd.f32 %v383, %v496
      %v498 = vpop.f32.mrf.mxu0
      %v499 = vadd.f32 %v383, %v498
      %v500 = vpop.f32.mrf.mxu0
      %v501 = vadd.f32 %v388, %v500
      %v502 = vpop.f32.mrf.mxu0
      %v503 = vadd.f32 %v388, %v502
      %504 = vmatprep.mubr.bf16.mxu0 0
      %505 = vmatmul.mubr.bf16.gmra.mxu0 %v445
      %v506 = vpop.f32.mrf.mxu0
      %v507 = vadd.f32 %v393, %v506
      %v508 = vpop.f32.mrf.mxu0
      %v509 = vadd.f32 %v393, %v508
      %v510 = vpop.f32.mrf.mxu0
      %v511 = vadd.f32 %v398, %v510
      %v512 = vpop.f32.mrf.mxu0
      %v513 = vadd.f32 %v398, %v512
      %514 = vmatprep.mubr.bf16.mxu0 0
      %515 = vmatmul.mubr.bf16.gmra.mxu0 %v448
      %v516 = vpop.f32.mrf.mxu0
      %v517 = vadd.f32 %v403, %v516
      %v518 = vpop.f32.mrf.mxu0
      %v519 = vadd.f32 %v403, %v518
      %v520 = vpop.f32.mrf.mxu0
      %v521 = vadd.f32 %v408, %v520
      %v522 = vpop.f32.mrf.mxu0
      %v523 = vadd.f32 %v408, %v522
      %524 = vmatprep.mubr.bf16.mxu0 0
      %525 = vmatmul.mubr.bf16.gmra.mxu0 %v451
      %v526 = vpop.f32.mrf.mxu0
      %v527 = vadd.f32 %v413, %v526
      %v528 = vpop.f32.mrf.mxu0
      %v529 = vadd.f32 %v413, %v528
      %v530 = vpop.f32.mrf.mxu0
      %v531 = vadd.f32 %v418, %v530
      %v532 = vpop.f32.mrf.mxu0
      %v533 = vadd.f32 %v418, %v532
      %534 = vdwg.mxu0
      %535 = vmatprep.subr.bf16.mxu0 0
      %536 = vmatpush1.bf16.msra.mxu0 0
      %537 = vmatprep.subr.bf16.mxu0 0
      %538 = vmatpush1.bf16.msra.mxu0 0
      %539 = vmatprep.subr.bf16.mxu0 0
      %540 = vmatpush1.bf16.msra.mxu0 0
      %541 = vmatprep.subr.bf16.mxu0 0
      %542 = vmatpush1.bf16.msra.mxu0 0
      %543 = vmatprep.subr.bf16.mxu0 0
      %544 = vmatpush1.bf16.msra.mxu0 0
      %545 = vmatprep.subr.bf16.mxu0 0
      %546 = vmatpush1.bf16.msra.mxu0 %v460
      %547 = vmatprep.subr.bf16.mxu0 0
      %548 = vmatpush1.bf16.msra.mxu0 %v362
      %549 = vmatprep.subr.bf16.mxu0 0
      %550 = vmatpush1.bf16.msra.mxu0 %v338
      %551 = vmatprep.subr.bf16.mxu0 0
      %552 = vmatpush2.bf16.msra.mxu0 0
      %553 = vmatprep.subr.bf16.mxu0 0
      %554 = vmatpush2.bf16.msra.mxu0 0
      %555 = vmatprep.subr.bf16.mxu0 0
      %556 = vmatpush2.bf16.msra.mxu0 0
      %557 = vmatprep.subr.bf16.mxu0 0
      %558 = vmatpush2.bf16.msra.mxu0 0
      %559 = vmatprep.subr.bf16.mxu0 0
      %560 = vmatpush2.bf16.msra.mxu0 0
      %561 = vmatprep.subr.bf16.mxu0 0
      %562 = vmatpush2.bf16.msra.mxu0 0
      %563 = vmatprep.subr.bf16.mxu0 0
      %564 = vmatpush2.bf16.msra.mxu0 0
      %565 = vmatprep.subr.bf16.mxu0 0
      %566 = vmatpush2.bf16.msra.mxu0 0
      %567 = vmatprep.mubr.bf16.mxu0 0
      %568 = vmatmul.mubr.bf16.gmra.mxu0 %v442
      %v569 = vpop.f32.mrf.mxu0
      %v570 = vadd.f32 %v383, %v569
      %v571 = vpop.f32.mrf.mxu0
      %v572 = vpop.f32.mrf.mxu0
      %v573 = vadd.f32 %v388, %v572
      %v574 = vpop.f32.mrf.mxu0
      %575 = vmatprep.mubr.bf16.mxu0 0
      %576 = vmatmul.mubr.bf16.gmra.mxu0 %v445
      %v577 = vpop.f32.mrf.mxu0
      %v578 = vadd.f32 %v393, %v577
      %v579 = vpop.f32.mrf.mxu0
      %v580 = vpop.f32.mrf.mxu0
      %v581 = vadd.f32 %v398, %v580
      %v582 = vpop.f32.mrf.mxu0
      %583 = vmatprep.mubr.bf16.mxu0 0
      %584 = vmatmul.mubr.bf16.gmra.mxu0 %v448
      %v585 = vpop.f32.mrf.mxu0
      %v586 = vadd.f32 %v403, %v585
      %v587 = vpop.f32.mrf.mxu0
      %v588 = vpop.f32.mrf.mxu0
      %v589 = vadd.f32 %v408, %v588
      %v590 = vpop.f32.mrf.mxu0
      %591 = vmatprep.mubr.bf16.mxu0 0
      %592 = vmatmul.mubr.bf16.gmra.mxu0 %v451
      %v593 = vpop.f32.mrf.mxu0
      %v594 = vadd.f32 %v413, %v593
      %v595 = vpop.f32.mrf.mxu0
      %v596 = vpop.f32.mrf.mxu0
      %v597 = vadd.f32 %v418, %v596
      %v598 = vpop.f32.mrf.mxu0
      %599 = vdwg.mxu0
      %v600 = vmax.f32 %v497, 0.0
      %v601 = vmax.f32 %v499, 0.0
      %v602 = vmax.f32 %v570, 0.0
      %v603 = vmax.f32 %v501, 0.0
      %v604 = vmax.f32 %v503, 0.0
      %v605 = vmax.f32 %v573, 0.0
      %v606 = vmax.f32 %v507, 0.0
      %v607 = vmax.f32 %v509, 0.0
      %v608 = vmax.f32 %v578, 0.0
      %v609 = vmax.f32 %v511, 0.0
      %v610 = vmax.f32 %v513, 0.0
      %v611 = vmax.f32 %v581, 0.0
      %v612 = vmax.f32 %v517, 0.0
      %v613 = vmax.f32 %v519, 0.0
      %v614 = vmax.f32 %v586, 0.0
      %v615 = vmax.f32 %v521, 0.0
      %v616 = vmax.f32 %v523, 0.0
      %v617 = vmax.f32 %v589, 0.0
      %v618 = vmax.f32 %v527, 0.0
      %v619 = vmax.f32 %v529, 0.0
      %v620 = vmax.f32 %v594, 0.0
      %v621 = vmax.f32 %v531, 0.0
      %v622 = vmax.f32 %v533, 0.0
      %v623 = vmax.f32 %v597, 0.0
      %v624 = vlaneseq
      %v625 = vand.u32 %v624, 127
      %v626 = vadd.s32 %v625, 128
      %v627 = vadd.s32 %v625, 256
      %vm628 = vcmp.lt.s32.totalorder %v625, 0
      %v629 = vsub.s32 0, %v625
      %v630 = vsel %vm628, %v629, %v625
      %v631 = vmul.u32.u64.compose %v630, 3817748708
      %v632 = vextract.low.u32 %v631
      %v633 = vextract.high.u32 %v631
      %v634 = vshrl.u32 %v633, 4
      %v635 = vmul.u32 %v634, 18
      %v636 = vsub.s32 %v630, %v635
      %v637 = vsub.s32 0, %v636
      %v638 = vsel %vm628, %v637, %v636
      %vm639 = vcmp.lt.s32.totalorder %v626, 0
      %v640 = vsub.s32 0, %v626
      %v641 = vsel %vm639, %v640, %v626
      %v642 = vmul.u32.u64.compose %v641, 3817748708
      %v643 = vextract.low.u32 %v642
      %v644 = vextract.high.u32 %v642
      %v645 = vshrl.u32 %v644, 4
      %v646 = vmul.u32 %v645, 18
      %v647 = vsub.s32 %v641, %v646
      %v648 = vsub.s32 0, %v647
      %v649 = vsel %vm639, %v648, %v647
      %vm650 = vcmp.lt.s32.totalorder %v627, 0
      %v651 = vsub.s32 0, %v627
      %v652 = vsel %vm650, %v651, %v627
      %v653 = vmul.u32.u64.compose %v652, 3817748708
      %v654 = vextract.low.u32 %v653
      %v655 = vextract.high.u32 %v653
      %v656 = vshrl.u32 %v655, 4
      %v657 = vmul.u32 %v656, 18
      %v658 = vsub.s32 %v652, %v657
      %v659 = vsub.s32 0, %v658
      %v660 = vsel %vm650, %v659, %v658
      %vm661 = vcmp.ne.s32.totalorder %v638, 0
      %vm662 = vcmp.ne.s32.totalorder %v649, 0
      %vm663 = vcmp.ne.s32.totalorder %v660, 0
      %vm664 = vcmp.lt.s32.totalorder %v638, 0
      %vm665 = vcmp.lt.s32.totalorder %v649, 0
      %vm666 = vcmp.lt.s32.totalorder %v660, 0
      %vm667 = vmand %vm664, %vm661
      %vm668 = vmand %vm665, %vm662
      %vm669 = vmand %vm666, %vm663
      %v670 = vadd.s32 %v638, 18
      %v671 = vadd.s32 %v649, 18
      %v672 = vadd.s32 %v660, 18
      %v673 = vsel %vm667, %v670, %v638
      %v674 = vsel %vm668, %v671, %v649
      %v675 = vsel %vm669, %v672, %v660
      %vm676 = vcmp.lt.s32.totalorder %v673, 16
      %vm677 = vcmp.lt.s32.totalorder %v674, 16
      %vm678 = vcmp.lt.s32.totalorder %v675, 16
      %v679 = vsel %vm676, 0.00390625, 0.0
      %v680 = vsel %vm677, 0.00390625, 0.0
      %v681 = vsel %vm678, 0.00390625, 0.0
      %v682 = vld [vmem:[%s196] sm:$0xff]
      %v683 = vld [vmem:[%s196 + $0x8] sm:$0xff]
      %v684 = vld [vmem:[%s196 + $0x10] sm:$0xff]
      %v685 = vld [vmem:[%s196 + $0x18] sm:$0xff]
      %v686 = vld [vmem:[%s196 + $0x20] sm:$0xff]
      %v687 = vld [vmem:[%s196 + $0x28] sm:$0xff]
      %v688 = vld [vmem:[%s196 + $0x30] sm:$0xff]
      %v689 = vld [vmem:[%s196 + $0x38] sm:$0xff]
      %v690 = vmul.f32 %v600, %v679
      %v691 = vmul.f32 %v601, %v680
      %v692 = vmul.f32 %v602, %v681
      %v693 = vmul.f32 %v603, %v679
      %v694 = vmul.f32 %v604, %v680
      %v695 = vmul.f32 %v605, %v681
      %v696 = vmul.f32 %v606, %v679
      %v697 = vmul.f32 %v607, %v680
      %v698 = vmul.f32 %v608, %v681
      %v699 = vmul.f32 %v609, %v679
      %v700 = vmul.f32 %v610, %v680
      %v701 = vmul.f32 %v611, %v681
      %v702 = vmul.f32 %v612, %v679
      %v703 = vmul.f32 %v613, %v680
      %v704 = vmul.f32 %v614, %v681
      %v705 = vmul.f32 %v615, %v679
      %v706 = vmul.f32 %v616, %v680
      %v707 = vmul.f32 %v617, %v681
      %v708 = vmul.f32 %v618, %v679
      %v709 = vmul.f32 %v619, %v680
      %v710 = vmul.f32 %v620, %v681
      %v711 = vmul.f32 %v621, %v679
      %v712 = vmul.f32 %v622, %v680
      %v713 = vmul.f32 %v623, %v681
      %v714 = vadd.f32 %v690, %v691
      %vm715 = vcmask 261120
      %v716 = vsel %vm715, %v692, 0.0
      %v717 = vadd.f32 %v714, %v716
      %718 = vadd.xlane.f32.xlu0 %v717
      %v719 = vpop.xlane.xlu0 %718
      %v720 = vadd.f32 %v693, %v694
      %v721 = vsel %vm715, %v695, 0.0
      %v722 = vadd.f32 %v720, %v721
      %723 = vadd.xlane.f32.xlu0 %v722
      %v724 = vpop.xlane.xlu0 %723
      %v725 = vadd.f32 %v696, %v697
      %v726 = vsel %vm715, %v698, 0.0
      %v727 = vadd.f32 %v725, %v726
      %728 = vadd.xlane.f32.xlu0 %v727
      %v729 = vpop.xlane.xlu0 %728
      %v730 = vadd.f32 %v699, %v700
      %v731 = vsel %vm715, %v701, 0.0
      %v732 = vadd.f32 %v730, %v731
      %733 = vadd.xlane.f32.xlu0 %v732
      %v734 = vpop.xlane.xlu0 %733
      %v735 = vadd.f32 %v702, %v703
      %v736 = vsel %vm715, %v704, 0.0
      %v737 = vadd.f32 %v735, %v736
      %738 = vadd.xlane.f32.xlu0 %v737
      %v739 = vpop.xlane.xlu0 %738
      %v740 = vadd.f32 %v705, %v706
      %v741 = vsel %vm715, %v707, 0.0
      %v742 = vadd.f32 %v740, %v741
      %743 = vadd.xlane.f32.xlu0 %v742
      %v744 = vpop.xlane.xlu0 %743
      %v745 = vadd.f32 %v708, %v709
      %v746 = vsel %vm715, %v710, 0.0
      %v747 = vadd.f32 %v745, %v746
      %748 = vadd.xlane.f32.xlu0 %v747
      %v749 = vpop.xlane.xlu0 %748
      %v750 = vadd.f32 %v711, %v712
      %v751 = vsel %vm715, %v713, 0.0
      %v752 = vadd.f32 %v750, %v751
      %753 = vadd.xlane.f32.xlu0 %v752
      %v754 = vpop.xlane.xlu0 %753
      %v755 = vadd.f32 %v682, %v719
      %v756 = vadd.f32 %v683, %v724
      %v757 = vadd.f32 %v684, %v729
      %v758 = vadd.f32 %v685, %v734
      %v759 = vadd.f32 %v686, %v739
      %v760 = vadd.f32 %v687, %v744
      %v761 = vadd.f32 %v688, %v749
      %v762 = vadd.f32 %v689, %v754
      %vm763 = vcmask 7168
      %764 = vst.msk [vmem:[%s196] sm:$0xff] %vm763, %v755
      %765 = vst.msk [vmem:[%s196 + $0x8] sm:$0xff] %vm763, %v756
      %766 = vst.msk [vmem:[%s196 + $0x10] sm:$0xff] %vm763, %v757
      %767 = vst.msk [vmem:[%s196 + $0x18] sm:$0xff] %vm763, %v758
      %768 = vst.msk [vmem:[%s196 + $0x20] sm:$0xff] %vm763, %v759
      %769 = vst.msk [vmem:[%s196 + $0x28] sm:$0xff] %vm763, %v760
      %770 = vst.msk [vmem:[%s196 + $0x30] sm:$0xff] %vm763, %v761
      %771 = vst.msk [vmem:[%s196 + $0x38] sm:$0xff] %vm763, %v762
      %p772 = scmp.lt.s32.totalorder %s18, 1
      %s773 = scalar_select %p772, %s18, 1
      %s774 = smul.addr %s773, 8
      %s775 = smul.addr %s774, 8
      %s776 = scalar_lea.vmem %s3, %s775
      // Predicated region
      $region37: #{tpu_custom_call.1} parent=31 // pred_check
        %p777 = pneg %p114
      $region38: #{tpu_custom_call.1} parent=31 // pred_check_branch
        %779 = sbr.rel (%p777) target = $region40
      $region39: #{tpu_custom_call.1} parent=31 // pred_region
        _
      $region40: #{tpu_custom_call.1} parent=31 // pred_fallthru
        _
    $region32: #{tpu_custom_call.1} parent=5 // pred_fallthru
      _
    %p780 = scmp.le.s32.totalorder 2, %s9
    // Predicated region
    $region41: #{tpu_custom_call.1} parent=5 // pred_check
      %p781 = pneg %p780
    $region42: #{tpu_custom_call.1} parent=5 // pred_check_branch
      %783 = sbr.rel (%p781) target = $region44
    $region43: #{tpu_custom_call.1} parent=5 // pred_region
      %s784 = ssub.s32 %s9, 2
      // Predicated region
      $region45: #{tpu_custom_call.1} parent=43 // pred_check
        %p785 = pneg %p120
      $region46: #{tpu_custom_call.1} parent=43 // pred_check_branch
        %787 = sbr.rel (%p785) target = $region48
      $region47: #{tpu_custom_call.1} parent=43 // pred_region
        %p788 = scmp.lt.s32.totalorder %s20, 1
        %s789 = scalar_select %p788, %s20, 1
        %s790 = smul.addr %s789, 8
        %s791 = smul.addr %s790, 8
        %s792 = scalar_lea.vmem %s3, %s791
      $region48: #{tpu_custom_call.1} parent=43 // pred_fallthru
        _
    $region44: #{tpu_custom_call.1} parent=5 // pred_fallthru
      _
  $region6: #{tpu_custom_call.1} parent=0 // loop_footer
    %s13 = sadd.s32 1, %s9
  $region7: #{tpu_custom_call.1} parent=0 // loop_footer_branch
    %8 = sbr.rel target = $region3
  $region8: #{tpu_custom_call.1} parent=0 // loop_exit
    _

</llo_original>
